<compile_context>
chip_gen: v6e
topology: v6e:2x2x1
jax: 0.10.0
libtpu: 0.0.40
codegen_flags: <defaults>
</compile_context>

<pallas_src>
import functools
import math

import jax
import jax.numpy as jnp
from jax import lax
from jax.experimental import pallas as pl
from jax.experimental.pallas import tpu as pltpu


def make_pe_table(d_model: int, embedding: int = 5000) -> jnp.ndarray:
    """Same construction as the torch __init__ (deterministic, no params)."""
    position = jnp.arange(embedding, dtype=jnp.float32)[:, None]          # [E, 1]
    div_term = jnp.exp(
        jnp.arange(0, d_model, 2, dtype=jnp.float32) * (-math.log(10000.0) / d_model)
    )                                                                      # [ceil(d/2)]
    pe = jnp.zeros((embedding, d_model), dtype=jnp.float32)
    pe = pe.at[:, 0::2].set(jnp.sin(position * div_term))
    # Guard odd d_model: the 1::2 slice only has floor(d_model/2) columns.
    pe = pe.at[:, 1::2].set(jnp.cos(position * div_term)[:, : d_model // 2])
    return pe


def _gather_tile_kernel(x_smem, pe_ref, out_ref, *, tq: int):
    # x_smem : (seq_padded,) int32 in SMEM (scalar prefetch)
    # pe_ref : (embedding, d_model) f32, resident in VMEM (constant block)
    # out_ref: (tq, d_model) f32 output tile
    base = pl.program_id(0) * tq
    n_groups = tq // 8  # tq is always a multiple of 8

    def group_body(g, carry):
        off = g * 8
        # Gather 8 rows (dynamic single-row VMEM loads), pack them into one
        # sublane-dense (8, d_model) value, store with a single vst.
        rows = []
        for j in range(8):                        # statically unrolled
            r = x_smem[base + off + j]            # scalar read from SMEM
            rows.append(pe_ref[pl.ds(r, 1), :])   # (1, d_model) VMEM row load
        block = jnp.concatenate(rows, axis=0)     # (8, d_model)
        out_ref[pl.ds(pl.multiple_of(off, 8), 8), :] = block
        return carry

    lax.fori_loop(0, n_groups, group_body, 0, unroll=min(n_groups, 8))


def _round_up(a: int, b: int) -> int:
    return ((a + b - 1) // b) * b


def _build_call(pe: jnp.ndarray, tq: int, num_tiles: int, seq_p: int, *,
                single_buffer_pe: bool):
    embedding, d_model = pe.shape
    pe_bytes = pe.size * pe.dtype.itemsize
    out_tile_bytes = tq * d_model * 4
    pe_buffers = 1 if single_buffer_pe else 2
    needed = pe_buffers * pe_bytes + 2 * out_tile_bytes + (2 << 20)

    # Generation-aware VMEM budget (v5e/v6e: 128 MiB physical, v7x: 64 MiB).
    try:
        phys = int(pltpu.get_tpu_info().vmem_capacity_bytes)
    except Exception:
        phys = 128 << 20
    cap = max(32 << 20, phys - (16 << 20))        # leave compiler-scratch headroom
    vmem_limit = int(min(max(needed, 32 << 20), cap))
    # TODO(synk): tables with pe_bytes > cap need a d_model-blocked (or per-tile
    # HBM-gather) path; not implemented here.

    if single_buffer_pe:
        pe_spec = pl.BlockSpec((embedding, d_model), lambda i, xs: (0, 0),
                               pipeline_mode=pl.Buffered(1))
    else:
        pe_spec = pl.BlockSpec((embedding, d_model), lambda i, xs: (0, 0))

    grid_spec = pltpu.PrefetchScalarGridSpec(
        num_scalar_prefetch=1,                    # x lands in SMEM
        grid=(num_tiles,),
        in_specs=[pe_spec],
        out_specs=pl.BlockSpec((tq, d_model), lambda i, xs: (i, 0)),
    )

    # Few tiles: a "parallel" split would make each TensorCore (v7x has 2)
    # re-fetch the full table; only shard when there is enough work per core.
    semantics = ("parallel",) if num_tiles >= 4 else ("arbitrary",)

    return pl.pallas_call(
        functools.partial(_gather_tile_kernel, tq=tq),
        out_shape=jax.ShapeDtypeStruct((seq_p, d_model), pe.dtype),
        grid_spec=grid_spec,
        compiler_params=pltpu.CompilerParams(
            dimension_semantics=semantics,
            vmem_limit_bytes=vmem_limit,
        ),
        cost_estimate=pl.CostEstimate(
            flops=0,
            transcendentals=0,
            bytes_accessed=int(pe_bytes + seq_p * d_model * 4 + seq_p * 4),
        ),
    )


def positional_encoding_lookup(pe: jnp.ndarray, x: jnp.ndarray, *, tq: int | None = None):
    """out[i, :] = pe[x[i], :] -- tiled Pallas gather with a VMEM-resident table."""
    embedding, d_model = pe.shape
    (seq,) = x.shape
    # Clamp: Pallas does no runtime bounds check on VMEM refs; OOB reads garbage.
    x = jnp.clip(x.astype(jnp.int32), 0, embedding - 1)

    # Tile of query rows per grid step: multiple of 8 (f32 sublane density).
    if tq is None:
        tq = min(256, _round_up(seq, 8))
    tq = max(8, _round_up(tq, 8))

    seq_p = _round_up(seq, tq)
    if seq_p != seq:
        x = jnp.pad(x, (0, seq_p - seq))          # pad with index 0 (always valid)
    num_tiles = seq_p // tq
    # TODO(synk): for very long sequences (100K+ indices) the full index vector
    # in SMEM becomes a problem; would need per-tile index slices.
    # TODO(synk): for seq << embedding an HBM-gather path (pe left in pl.ANY,
    # per-tile row DMAs) would avoid reading the whole table.

    try:
        out = _build_call(pe, tq, num_tiles, seq_p, single_buffer_pe=True)(x, pe)
    except Exception:
        # Fallback if this Pallas build rejects pl.Buffered(1) on a constant block.
        out = _build_call(pe, tq, num_tiles, seq_p, single_buffer_pe=False)(x, pe)

    return out[:seq]


if __name__ == "__main__":
    d_model = 32
    embedding = 128
    seq = 8

    pe = make_pe_table(d_model, embedding)

    key = jax.random.PRNGKey(0)
    x = jax.random.randint(key, (seq,), minval=0, maxval=embedding, dtype=jnp.int32)

    out = positional_encoding_lookup(pe, x)
    out = jax.block_until_ready(out)

    # reference check against plain JAX gather (same semantics as torch pe[x])
    ref = pe[x]
    assert out.shape == (seq, d_model)
    assert out.dtype == jnp.float32
    assert jnp.allclose(out, ref), "Pallas gather mismatch vs reference"

    print("KERNEL_OK")
</pallas_src>

<mosaic_0001>
module attributes {stable_mosaic.version = 11 : i64} {
  func.func @_gather_tile_kernel(%arg0: i32, %arg1: memref<8xi32, #tpu.memory_space<smem>>, %arg2: memref<128x32xf32, #tpu.memory_space<vmem>>, %arg3: memref<8x32xf32, #tpu.memory_space<vmem>>) attributes {dimension_semantics = [#tpu.dimension_semantics<arbitrary>], iteration_bounds = array<i64: 1>, scalar_prefetch = 1 : i64, scratch_operands = 0 : i64, tpu.core_type = #tpu.core_type<tc>, window_params = [{pipeline_mode = #tpu.pipeline_mode<synchronous>, transform_indices = @transform_0, window_bounds = array<i64: 128, 32>}, {transform_indices = @transform_1, window_bounds = array<i64: 8, 32>}]} {
    %c8_i32 = arith.constant 8 : i32
    %0 = arith.muli %arg0, %c8_i32 : i32
    %c0_i32 = arith.constant 0 : i32
    %c8_i32_0 = arith.constant 8 : i32
    %1 = arith.muli %c0_i32, %c8_i32_0 : i32
    %2 = arith.addi %0, %1 : i32
    %c0_i32_1 = arith.constant 0 : i32
    %3 = arith.addi %2, %c0_i32_1 : i32
    %4 = arith.index_cast %3 : i32 to index
    %5 = memref.load %arg1[%4] : memref<8xi32, #tpu.memory_space<smem>>
    %6 = arith.index_cast %5 : i32 to index
    %c0 = arith.constant 0 : index
    %7 = vector.load %arg2[%6, %c0] : memref<128x32xf32, #tpu.memory_space<vmem>>, vector<1x32xf32>
    %8 = arith.addi %0, %1 : i32
    %c1_i32 = arith.constant 1 : i32
    %9 = arith.addi %8, %c1_i32 : i32
    %10 = arith.index_cast %9 : i32 to index
    %11 = memref.load %arg1[%10] : memref<8xi32, #tpu.memory_space<smem>>
    %12 = arith.index_cast %11 : i32 to index
    %c0_2 = arith.constant 0 : index
    %13 = vector.load %arg2[%12, %c0_2] : memref<128x32xf32, #tpu.memory_space<vmem>>, vector<1x32xf32>
    %14 = arith.addi %0, %1 : i32
    %c2_i32 = arith.constant 2 : i32
    %15 = arith.addi %14, %c2_i32 : i32
    %16 = arith.index_cast %15 : i32 to index
    %17 = memref.load %arg1[%16] : memref<8xi32, #tpu.memory_space<smem>>
    %18 = arith.index_cast %17 : i32 to index
    %c0_3 = arith.constant 0 : index
    %19 = vector.load %arg2[%18, %c0_3] : memref<128x32xf32, #tpu.memory_space<vmem>>, vector<1x32xf32>
    %20 = arith.addi %0, %1 : i32
    %c3_i32 = arith.constant 3 : i32
    %21 = arith.addi %20, %c3_i32 : i32
    %22 = arith.index_cast %21 : i32 to index
    %23 = memref.load %arg1[%22] : memref<8xi32, #tpu.memory_space<smem>>
    %24 = arith.index_cast %23 : i32 to index
    %c0_4 = arith.constant 0 : index
    %25 = vector.load %arg2[%24, %c0_4] : memref<128x32xf32, #tpu.memory_space<vmem>>, vector<1x32xf32>
    %26 = arith.addi %0, %1 : i32
    %c4_i32 = arith.constant 4 : i32
    %27 = arith.addi %26, %c4_i32 : i32
    %28 = arith.index_cast %27 : i32 to index
    %29 = memref.load %arg1[%28] : memref<8xi32, #tpu.memory_space<smem>>
    %30 = arith.index_cast %29 : i32 to index
    %c0_5 = arith.constant 0 : index
    %31 = vector.load %arg2[%30, %c0_5] : memref<128x32xf32, #tpu.memory_space<vmem>>, vector<1x32xf32>
    %32 = arith.addi %0, %1 : i32
    %c5_i32 = arith.constant 5 : i32
    %33 = arith.addi %32, %c5_i32 : i32
    %34 = arith.index_cast %33 : i32 to index
    %35 = memref.load %arg1[%34] : memref<8xi32, #tpu.memory_space<smem>>
    %36 = arith.index_cast %35 : i32 to index
    %c0_6 = arith.constant 0 : index
    %37 = vector.load %arg2[%36, %c0_6] : memref<128x32xf32, #tpu.memory_space<vmem>>, vector<1x32xf32>
    %38 = arith.addi %0, %1 : i32
    %c6_i32 = arith.constant 6 : i32
    %39 = arith.addi %38, %c6_i32 : i32
    %40 = arith.index_cast %39 : i32 to index
    %41 = memref.load %arg1[%40] : memref<8xi32, #tpu.memory_space<smem>>
    %42 = arith.index_cast %41 : i32 to index
    %c0_7 = arith.constant 0 : index
    %43 = vector.load %arg2[%42, %c0_7] : memref<128x32xf32, #tpu.memory_space<vmem>>, vector<1x32xf32>
    %44 = arith.addi %0, %1 : i32
    %c7_i32 = arith.constant 7 : i32
    %45 = arith.addi %44, %c7_i32 : i32
    %46 = arith.index_cast %45 : i32 to index
    %47 = memref.load %arg1[%46] : memref<8xi32, #tpu.memory_space<smem>>
    %48 = arith.index_cast %47 : i32 to index
    %c0_8 = arith.constant 0 : index
    %49 = vector.load %arg2[%48, %c0_8] : memref<128x32xf32, #tpu.memory_space<vmem>>, vector<1x32xf32>
    %50 = tpu.concatenate %7, %13, %19, %25, %31, %37, %43, %49 in 0 : vector<1x32xf32>, vector<1x32xf32>, vector<1x32xf32>, vector<1x32xf32>, vector<1x32xf32>, vector<1x32xf32>, vector<1x32xf32>, vector<1x32xf32> -> vector<8x32xf32>
    %51 = tpu.assume_multiple %1, 8 : i32
    %52 = arith.index_cast %51 : i32 to index
    %c0_9 = arith.constant 0 : index
    %53 = vector.load %arg3[%52, %c0_9] : memref<8x32xf32, #tpu.memory_space<vmem>>, vector<8x32xf32>
    tpu.vector_store %arg3[%52, %c0_9], %50 {strides = array<i32>} : memref<8x32xf32, #tpu.memory_space<vmem>>, vector<8x32xf32>,
    %c1_i32_10 = arith.constant 1 : i32
    return
  }
  func.func @transform_0(%arg0: i32, %arg1: memref<8xi32, #tpu.memory_space<smem>>) -> (i32, i32) {
    %c0_i32 = arith.constant 0 : i32
    %c0_i32_0 = arith.constant 0 : i32
    %c0_i32_1 = arith.constant 0 : i32
    return %c0_i32, %c0_i32_0 : i32, i32
  }
  func.func @transform_1(%arg0: i32, %arg1: memref<8xi32, #tpu.memory_space<smem>>) -> (i32, i32) {
    %c0_i32 = arith.constant 0 : i32
    %c0_i32_0 = arith.constant 0 : i32
    return %arg0, %c0_i32 : i32, i32
  }
}

module attributes {stable_mosaic.version = 11 : i64} {
  func.func @_gather_tile_kernel(%arg0: i32, %arg1: memref<8xi32, #tpu.memory_space<smem>>, %arg2: memref<128x32xf32, #tpu.memory_space<vmem>>, %arg3: memref<8x32xf32, #tpu.memory_space<vmem>>) attributes {dimension_semantics = [#tpu.dimension_semantics<arbitrary>], iteration_bounds = array<i64: 1>, scalar_prefetch = 1 : i64, scratch_operands = 0 : i64, tpu.core_type = #tpu.core_type<tc>, window_params = [{pipeline_mode = #tpu.pipeline_mode<synchronous>, transform_indices = @transform_0, window_bounds = array<i64: 128, 32>}, {transform_indices = @transform_1, window_bounds = array<i64: 8, 32>}]} {
    %c8_i32 = arith.constant 8 : i32
    %0 = arith.muli %arg0, %c8_i32 : i32
    %c0_i32 = arith.constant 0 : i32
    %c8_i32_0 = arith.constant 8 : i32
    %1 = arith.muli %c0_i32, %c8_i32_0 : i32
    %2 = arith.addi %0, %1 : i32
    %c0_i32_1 = arith.constant 0 : i32
    %3 = arith.addi %2, %c0_i32_1 : i32
    %4 = arith.index_cast %3 : i32 to index
    %5 = memref.load %arg1[%4] : memref<8xi32, #tpu.memory_space<smem>>
    %6 = arith.index_cast %5 : i32 to index
    %c0 = arith.constant 0 : index
    %7 = vector.load %arg2[%6, %c0] : memref<128x32xf32, #tpu.memory_space<vmem>>, vector<1x32xf32>
    %8 = arith.addi %0, %1 : i32
    %c1_i32 = arith.constant 1 : i32
    %9 = arith.addi %8, %c1_i32 : i32
    %10 = arith.index_cast %9 : i32 to index
    %11 = memref.load %arg1[%10] : memref<8xi32, #tpu.memory_space<smem>>
    %12 = arith.index_cast %11 : i32 to index
    %c0_2 = arith.constant 0 : index
    %13 = vector.load %arg2[%12, %c0_2] : memref<128x32xf32, #tpu.memory_space<vmem>>, vector<1x32xf32>
    %14 = arith.addi %0, %1 : i32
    %c2_i32 = arith.constant 2 : i32
    %15 = arith.addi %14, %c2_i32 : i32
    %16 = arith.index_cast %15 : i32 to index
    %17 = memref.load %arg1[%16] : memref<8xi32, #tpu.memory_space<smem>>
    %18 = arith.index_cast %17 : i32 to index
    %c0_3 = arith.constant 0 : index
    %19 = vector.load %arg2[%18, %c0_3] : memref<128x32xf32, #tpu.memory_space<vmem>>, vector<1x32xf32>
    %20 = arith.addi %0, %1 : i32
    %c3_i32 = arith.constant 3 : i32
    %21 = arith.addi %20, %c3_i32 : i32
    %22 = arith.index_cast %21 : i32 to index
    %23 = memref.load %arg1[%22] : memref<8xi32, #tpu.memory_space<smem>>
    %24 = arith.index_cast %23 : i32 to index
    %c0_4 = arith.constant 0 : index
    %25 = vector.load %arg2[%24, %c0_4] : memref<128x32xf32, #tpu.memory_space<vmem>>, vector<1x32xf32>
    %26 = arith.addi %0, %1 : i32
    %c4_i32 = arith.constant 4 : i32
    %27 = arith.addi %26, %c4_i32 : i32
    %28 = arith.index_cast %27 : i32 to index
    %29 = memref.load %arg1[%28] : memref<8xi32, #tpu.memory_space<smem>>
    %30 = arith.index_cast %29 : i32 to index
    %c0_5 = arith.constant 0 : index
    %31 = vector.load %arg2[%30, %c0_5] : memref<128x32xf32, #tpu.memory_space<vmem>>, vector<1x32xf32>
    %32 = arith.addi %0, %1 : i32
    %c5_i32 = arith.constant 5 : i32
    %33 = arith.addi %32, %c5_i32 : i32
    %34 = arith.index_cast %33 : i32 to index
    %35 = memref.load %arg1[%34] : memref<8xi32, #tpu.memory_space<smem>>
    %36 = arith.index_cast %35 : i32 to index
    %c0_6 = arith.constant 0 : index
    %37 = vector.load %arg2[%36, %c0_6] : memref<128x32xf32, #tpu.memory_space<vmem>>, vector<1x32xf32>
    %38 = arith.addi %0, %1 : i32
    %c6_i32 = arith.constant 6 : i32
    %39 = arith.addi %38, %c6_i32 : i32
    %40 = arith.index_cast %39 : i32 to index
    %41 = memref.load %arg1[%40] : memref<8xi32, #tpu.memory_space<smem>>
    %42 = arith.index_cast %41 : i32 to index
    %c0_7 = arith.constant 0 : index
    %43 = vector.load %arg2[%42, %c0_7] : memref<128x32xf32, #tpu.memory_space<vmem>>, vector<1x32xf32>
    %44 = arith.addi %0, %1 : i32
    %c7_i32 = arith.constant 7 : i32
    %45 = arith.addi %44, %c7_i32 : i32
    %46 = arith.index_cast %45 : i32 to index
    %47 = memref.load %arg1[%46] : memref<8xi32, #tpu.memory_space<smem>>
    %48 = arith.index_cast %47 : i32 to index
    %c0_8 = arith.constant 0 : index
    %49 = vector.load %arg2[%48, %c0_8] : memref<128x32xf32, #tpu.memory_space<vmem>>, vector<1x32xf32>
    %50 = tpu.concatenate %7, %13, %19, %25, %31, %37, %43, %49 in 0 : vector<1x32xf32>, vector<1x32xf32>, vector<1x32xf32>, vector<1x32xf32>, vector<1x32xf32>, vector<1x32xf32>, vector<1x32xf32>, vector<1x32xf32> -> vector<8x32xf32>
    %51 = tpu.assume_multiple %1, 8 : i32
    %52 = arith.index_cast %51 : i32 to index
    %c0_9 = arith.constant 0 : index
    %53 = vector.load %arg3[%52, %c0_9] : memref<8x32xf32, #tpu.memory_space<vmem>>, vector<8x32xf32>
    tpu.vector_store %arg3[%52, %c0_9], %50 {strides = array<i32>} : memref<8x32xf32, #tpu.memory_space<vmem>>, vector<8x32xf32>,
    %c1_i32_10 = arith.constant 1 : i32
    return
  }
  func.func @transform_0(%arg0: i32, %arg1: memref<8xi32, #tpu.memory_space<smem>>) -> (i32, i32) {
    %c0_i32 = arith.constant 0 : i32
    %c0_i32_0 = arith.constant 0 : i32
    %c0_i32_1 = arith.constant 0 : i32
    return %c0_i32, %c0_i32_0 : i32, i32
  }
  func.func @transform_1(%arg0: i32, %arg1: memref<8xi32, #tpu.memory_space<smem>>) -> (i32, i32) {
    %c0_i32 = arith.constant 0 : i32
    %c0_i32_0 = arith.constant 0 : i32
    return %arg0, %c0_i32 : i32, i32
  }
}

</mosaic_0001>

<llo_original>
// kernel: tpu_custom_call.1
$region0: #{tpu_custom_call.1}
  #allocation0 [shape = 'u32[]', space=smem, size = 0x4, offset = 0x4, fixed_abs, tag = 'smem constant byte address 0x4 - core index']
  #allocation1 [shape = 'u32[144,128]{1,0:T(1,128)}', space=vmem, size = 0x12000, scoped, tag = 'internal scratch']
  #allocation2 [shape = 's32[1]{0}', space=sflag, size = 0x4, scoped, tag = 'scoped memory for tpu_custom_call.1']
  #allocation3 [shape = 'u8[512]{0}', space=smem, size = 0x200, scoped, tag = 'prefetched SMEM operand 0']
  %s0 = inlined_call_operand.vmem [shape: s32[8], index: 0, kind: input, shape index: {}]
  %s1 = inlined_call_operand.vmem [shape: f32[128,32], index: 1, kind: input, shape index: {}]
  %s2 = inlined_call_operand.hbm [shape: f32[8,32], index: 2, kind: output, shape index: {}]
  %s3 = sld [smem:[#allocation0]]
  $region14: #{tpu_custom_call.1} parent=0
    _
  %s5 = ssub.s32 1, %s3
  %s6 = scalar_select 0, %s5, %s3
  %s7 = sshll.u32 %s0, 4
  %s8 = int_to_ptr.vmem [resolvable:$true] %s7
  %10 = dma.vmem_to_smem %s8, 16, [#allocation3], [#allocation2]
  %11 = dma.done [#allocation2], 16
  %12 = sfence
  $region1: #{tpu_custom_call.1} parent=0
    #allocation4 [shape = 'u8[4096]{0}', space=vmem, size = 0x1000, scoped, tag = 'output window, operand 0, single buffered']
    #allocation5 [shape = 's32[1]{0}', space=sflag, size = 0x4, scoped, tag = 'scoped memory for tpu_custom_call.1']
    %13 = vsyncpa [#allocation5], 0
    // Predicated region
    $region2: #{tpu_custom_call.1} parent=1 // pred_check
      _
    $region3: #{tpu_custom_call.1} parent=1 // pred_check_branch
      %15 = sbr.rel (0) target = $region5
    $region4: #{tpu_custom_call.1} parent=1 // pred_region
      _
    $region5: #{tpu_custom_call.1} parent=1 // pred_fallthru
      _
    %s16 = smul.u32 0, 8
    %s17 = sld [smem:[#allocation3 + %s16]]
    %s18 = scalar_lea.vmem %s1, %s17
    %v19 = vld [vmem:[%s18] sm:$0x1]
    %s20 = sadd.s32 %s16, 1
    %s21 = sld [smem:[#allocation3 + %s20]]
    %s22 = scalar_lea.vmem %s1, %s21
    %v23 = vld [vmem:[%s22] sm:$0x1]
    %s24 = sadd.s32 %s16, 2
    %s25 = sld [smem:[#allocation3 + %s24]]
    %s26 = scalar_lea.vmem %s1, %s25
    %v27 = vld [vmem:[%s26] sm:$0x1]
    %s28 = sadd.s32 %s16, 3
    %s29 = sld [smem:[#allocation3 + %s28]]
    %s30 = scalar_lea.vmem %s1, %s29
    %v31 = vld [vmem:[%s30] sm:$0x1]
    %s32 = sadd.s32 %s16, 4
    %s33 = sld [smem:[#allocation3 + %s32]]
    %s34 = scalar_lea.vmem %s1, %s33
    %v35 = vld [vmem:[%s34] sm:$0x1]
    %s36 = sadd.s32 %s16, 5
    %s37 = sld [smem:[#allocation3 + %s36]]
    %s38 = scalar_lea.vmem %s1, %s37
    %v39 = vld [vmem:[%s38] sm:$0x1]
    %s40 = sadd.s32 %s16, 6
    %s41 = sld [smem:[#allocation3 + %s40]]
    %s42 = scalar_lea.vmem %s1, %s41
    %v43 = vld [vmem:[%s42] sm:$0x1]
    %s44 = sadd.s32 %s16, 7
    %s45 = sld [smem:[#allocation3 + %s44]]
    %s46 = scalar_lea.vmem %s1, %s45
    %v47 = vld [vmem:[%s46] sm:$0x1]
    %v49 = vrot.slane %v23, 7
    %v52 = vrot.slane %v27, 6
    %v55 = vrot.slane %v31, 5
    %v58 = vrot.slane %v35, 4
    %v61 = vrot.slane %v39, 3
    %v64 = vrot.slane %v43, 2
    %v67 = vrot.slane %v47, 1
    %vm69 = vcmask 1040384
    %v70 = vsel %vm69, %v19, %v49
    %vm71 = vcmask 1041408
    %v72 = vsel %vm71, %v70, %v52
    %vm73 = vcmask 1042432
    %v74 = vsel %vm73, %v72, %v55
    %vm75 = vcmask 1043456
    %v76 = vsel %vm75, %v74, %v58
    %vm77 = vcmask 1044480
    %v78 = vsel %vm77, %v76, %v61
    %vm79 = vcmask 1045504
    %v80 = vsel %vm79, %v78, %v64
    %vm81 = vcmask 1046528
    %v82 = vsel %vm81, %v80, %v67
    %vm83 = vcmask 261120
    %84 = vst.msk [vmem:[#allocation4] sm:$0xff] %vm83, %v82
    // Predicated region
    $region6: #{tpu_custom_call.1} parent=1 // pred_check
      _
    $region7: #{tpu_custom_call.1} parent=1 // pred_check_branch
      %86 = sbr.rel (0) target = $region9
    $region8: #{tpu_custom_call.1} parent=1 // pred_region
      %s88 = ssub.s32 128, 128
      %89 = vsyncadd [#allocation5], %s88
      %s91 = sshll.u32 [#allocation4], 4
      %s92 = int_to_ptr.vmem [resolvable:$true] %s91
      %94 = dma.vmem_to_hbm [thread:$0]  %s92, 128, %s2, [#allocation5]
    $region9: #{tpu_custom_call.1} parent=1 // pred_fallthru
      _
    // Predicated region
    $region10: #{tpu_custom_call.1} parent=1 // pred_check
      _
    $region11: #{tpu_custom_call.1} parent=1 // pred_check_branch
      %96 = sbr.rel (0) target = $region13
    $region12: #{tpu_custom_call.1} parent=1 // pred_region
      %97 = dma.done [#allocation5], 128
    $region13: #{tpu_custom_call.1} parent=1 // pred_fallthru
      _
    %98 = vsyncpa [#allocation5], 1

// kernel: tpu_custom_call.1
$region0: #{tpu_custom_call.1}
  #allocation0 [shape = 'u32[]', space=smem, size = 0x4, offset = 0x4, fixed_abs, tag = 'smem constant byte address 0x4 - core index']
  #allocation1 [shape = 'u32[144,128]{1,0:T(1,128)}', space=vmem, size = 0x12000, scoped, tag = 'internal scratch']
  #allocation2 [shape = 's32[1]{0}', space=sflag, size = 0x4, scoped, tag = 'scoped memory for tpu_custom_call.1']
  #allocation3 [shape = 'u8[512]{0}', space=smem, size = 0x200, scoped, tag = 'prefetched SMEM operand 0']
  %s0 = inlined_call_operand.vmem [shape: s32[8], index: 0, kind: input, shape index: {}]
  %s1 = inlined_call_operand.vmem [shape: f32[128,32], index: 1, kind: input, shape index: {}]
  %s2 = inlined_call_operand.hbm [shape: f32[8,32], index: 2, kind: output, shape index: {}]
  %s3 = sld [smem:[#allocation0]]
  $region14: #{tpu_custom_call.1} parent=0
    _
  %s5 = ssub.s32 1, %s3
  %s6 = scalar_select 0, %s5, %s3
  %s7 = sshll.u32 %s0, 4
  %s8 = int_to_ptr.vmem [resolvable:$true] %s7
  %10 = dma.vmem_to_smem %s8, 16, [#allocation3], [#allocation2]
  %11 = dma.done [#allocation2], 16
  %12 = sfence
  $region1: #{tpu_custom_call.1} parent=0
    #allocation4 [shape = 'u8[4096]{0}', space=vmem, size = 0x1000, scoped, tag = 'output window, operand 0, single buffered']
    #allocation5 [shape = 's32[1]{0}', space=sflag, size = 0x4, scoped, tag = 'scoped memory for tpu_custom_call.1']
    %13 = vsyncpa [#allocation5], 0
    // Predicated region
    $region2: #{tpu_custom_call.1} parent=1 // pred_check
      _
    $region3: #{tpu_custom_call.1} parent=1 // pred_check_branch
      %15 = sbr.rel (0) target = $region5
    $region4: #{tpu_custom_call.1} parent=1 // pred_region
      _
    $region5: #{tpu_custom_call.1} parent=1 // pred_fallthru
      _
    %s16 = smul.u32 0, 8
    %s17 = sld [smem:[#allocation3 + %s16]]
    %s18 = scalar_lea.vmem %s1, %s17
    %v19 = vld [vmem:[%s18] sm:$0x1]
    %s20 = sadd.s32 %s16, 1
    %s21 = sld [smem:[#allocation3 + %s20]]
    %s22 = scalar_lea.vmem %s1, %s21
    %v23 = vld [vmem:[%s22] sm:$0x1]
    %s24 = sadd.s32 %s16, 2
    %s25 = sld [smem:[#allocation3 + %s24]]
    %s26 = scalar_lea.vmem %s1, %s25
    %v27 = vld [vmem:[%s26] sm:$0x1]
    %s28 = sadd.s32 %s16, 3
    %s29 = sld [smem:[#allocation3 + %s28]]
    %s30 = scalar_lea.vmem %s1, %s29
    %v31 = vld [vmem:[%s30] sm:$0x1]
    %s32 = sadd.s32 %s16, 4
    %s33 = sld [smem:[#allocation3 + %s32]]
    %s34 = scalar_lea.vmem %s1, %s33
    %v35 = vld [vmem:[%s34] sm:$0x1]
    %s36 = sadd.s32 %s16, 5
    %s37 = sld [smem:[#allocation3 + %s36]]
    %s38 = scalar_lea.vmem %s1, %s37
    %v39 = vld [vmem:[%s38] sm:$0x1]
    %s40 = sadd.s32 %s16, 6
    %s41 = sld [smem:[#allocation3 + %s40]]
    %s42 = scalar_lea.vmem %s1, %s41
    %v43 = vld [vmem:[%s42] sm:$0x1]
    %s44 = sadd.s32 %s16, 7
    %s45 = sld [smem:[#allocation3 + %s44]]
    %s46 = scalar_lea.vmem %s1, %s45
    %v47 = vld [vmem:[%s46] sm:$0x1]
    %v49 = vrot.slane %v23, 7
    %v52 = vrot.slane %v27, 6
    %v55 = vrot.slane %v31, 5
    %v58 = vrot.slane %v35, 4
    %v61 = vrot.slane %v39, 3
    %v64 = vrot.slane %v43, 2
    %v67 = vrot.slane %v47, 1
    %vm69 = vcmask 1040384
    %v70 = vsel %vm69, %v19, %v49
    %vm71 = vcmask 1041408
    %v72 = vsel %vm71, %v70, %v52
    %vm73 = vcmask 1042432
    %v74 = vsel %vm73, %v72, %v55
    %vm75 = vcmask 1043456
    %v76 = vsel %vm75, %v74, %v58
    %vm77 = vcmask 1044480
    %v78 = vsel %vm77, %v76, %v61
    %vm79 = vcmask 1045504
    %v80 = vsel %vm79, %v78, %v64
    %vm81 = vcmask 1046528
    %v82 = vsel %vm81, %v80, %v67
    %vm83 = vcmask 261120
    %84 = vst.msk [vmem:[#allocation4] sm:$0xff] %vm83, %v82
    // Predicated region
    $region6: #{tpu_custom_call.1} parent=1 // pred_check
      _
    $region7: #{tpu_custom_call.1} parent=1 // pred_check_branch
      %86 = sbr.rel (0) target = $region9
    $region8: #{tpu_custom_call.1} parent=1 // pred_region
      %s88 = ssub.s32 128, 128
      %89 = vsyncadd [#allocation5], %s88
      %s91 = sshll.u32 [#allocation4], 4
      %s92 = int_to_ptr.vmem [resolvable:$true] %s91
      %94 = dma.vmem_to_hbm [thread:$0]  %s92, 128, %s2, [#allocation5]
    $region9: #{tpu_custom_call.1} parent=1 // pred_fallthru
      _
    // Predicated region
    $region10: #{tpu_custom_call.1} parent=1 // pred_check
      _
    $region11: #{tpu_custom_call.1} parent=1 // pred_check_branch
      %96 = sbr.rel (0) target = $region13
    $region12: #{tpu_custom_call.1} parent=1 // pred_region
      %97 = dma.done [#allocation5], 128
    $region13: #{tpu_custom_call.1} parent=1 // pred_fallthru
      _
    %98 = vsyncpa [#allocation5], 1

</llo_original>
